<compile_context>
chip_gen: v5e
topology: v5e:2x2
jax: 0.10.0
libtpu: 0.0.40
codegen_flags: <defaults>
</compile_context>

<pallas_src>
import functools

import jax
import jax.numpy as jnp
from jax.experimental import pallas as pl
from jax.experimental.pallas import tpu as pltpu

LANE = 128


def _round_up(v, m):
    return ((v + m - 1) // m) * m


def _vmem_budget_bytes():
    """~75% of physical VMEM: 48 MiB on v7x (64 MiB), 96 MiB on v5e/v6e (128 MiB)."""
    phys = 64 * 1024 * 1024  # conservative fallback (v7x-sized)
    try:
        info = pltpu.get_tpu_info()
        phys = int(getattr(info, "vmem_capacity_bytes", phys))
    except Exception:
        pass
    return (phys * 3) // 4


# ------------------------------ Pallas kernels ------------------------------ #
def _spmm_fused_w_kernel(a_ref, h_ref, w_ref, b_ref, o_ref, acc_ref, *, apply_relu):
    """O = relu?((A_hat @ H) @ W + b). Grid axis 1 is the K reduction."""
    k = pl.program_id(1)

    @pl.when(k == 0)
    def _():
        acc_ref[...] = jnp.zeros_like(acc_ref)

    acc_ref[...] += jnp.dot(a_ref[...], h_ref[...], preferred_element_type=jnp.float32)

    @pl.when(k == pl.num_programs(1) - 1)
    def _():
        out = jnp.dot(acc_ref[...].astype(jnp.bfloat16), w_ref[...],
                      preferred_element_type=jnp.float32) + b_ref[...]
        if apply_relu:
            out = jnp.maximum(out, 0.0)
        o_ref[...] = out.astype(o_ref.dtype)


def _spmm_bias_kernel(a_ref, h_ref, b_ref, o_ref, acc_ref, *, apply_relu):
    """O = relu?(A_hat @ H + b), bf16 output (f32 scratch accumulator)."""
    k = pl.program_id(1)

    @pl.when(k == 0)
    def _():
        acc_ref[...] = jnp.zeros_like(acc_ref)

    acc_ref[...] += jnp.dot(a_ref[...], h_ref[...], preferred_element_type=jnp.float32)

    @pl.when(k == pl.num_programs(1) - 1)
    def _():
        out = acc_ref[...] + b_ref[...]
        if apply_relu:
            out = jnp.maximum(out, 0.0)
        o_ref[...] = out.astype(o_ref.dtype)


def _spmm_bias_f32_kernel(a_ref, h_ref, b_ref, o_ref, *, apply_relu):
    """O = relu?(A_hat @ H + b), f32 output: accumulate directly in resident o_ref."""
    k = pl.program_id(1)

    @pl.when(k == 0)
    def _():
        o_ref[...] = jnp.zeros_like(o_ref)

    o_ref[...] += jnp.dot(a_ref[...], h_ref[...], preferred_element_type=jnp.float32)

    @pl.when(k == pl.num_programs(1) - 1)
    def _():
        out = o_ref[...] + b_ref[...]
        if apply_relu:
            out = jnp.maximum(out, 0.0)
        o_ref[...] = out


def _rowmm_kernel(x_ref, w_ref, o_ref):
    """Row-tiled O = X @ W (no bias/activation), bf16 output."""
    o_ref[...] = jnp.dot(x_ref[...], w_ref[...],
                         preferred_element_type=jnp.float32).astype(o_ref.dtype)


def _fused_gcn_kernel(*refs, n_layers, dims):
    """Whole multi-layer GCN forward, everything VMEM-resident (small graphs)."""
    a_ref, h_ref = refs[0], refs[1]
    w_refs = refs[2:2 + n_layers]
    b_refs = refs[2 + n_layers:2 + 2 * n_layers]
    o_ref = refs[2 + 2 * n_layers]

    a = a_ref[...]                      # bf16
    h = h_ref[...]                      # bf16
    for li in range(n_layers):
        w = w_refs[li][...]             # bf16
        b = b_refs[li][...]             # f32
        f_in, f_out = dims[li]
        if f_in < f_out:                # (A @ X) @ W
            t = jnp.dot(a, h, preferred_element_type=jnp.float32).astype(jnp.bfloat16)
            z = jnp.dot(t, w, preferred_element_type=jnp.float32) + b
        else:                           # A @ (X @ W)
            t = jnp.dot(h, w, preferred_element_type=jnp.float32).astype(jnp.bfloat16)
            z = jnp.dot(a, t, preferred_element_type=jnp.float32) + b
        if li < n_layers - 1:
            h = jnp.maximum(z, 0.0).astype(jnp.bfloat16)
        else:
            o_ref[...] = z              # final logits stay f32


# --------------------------- tile-size derivation ---------------------------- #
def _tile_candidates(n_pad):
    cands = [t for t in (1024, 512, 256, 128) if n_pad % t == 0]
    return cands if cands else [n_pad]


def _spmm_bytes(tm, tk, f_in_pad, f_out_pad, out_bytes, fuse_w):
    a = 3 * tm * tk * 2                      # A tiles (bf16), up to 3 buffers
    h = 2 * tk * f_in_pad * 2                # H tiles (bf16), double buffered
    acc = tm * f_in_pad * 4                  # f32 accumulator
    w = 2 * f_in_pad * f_out_pad * 2 if fuse_w else 0
    o = 2 * tm * f_out_pad * out_bytes
    b = 2 * f_out_pad * 4
    return a + h + acc + w + o + b


def _pick_spmm_tiles(n_pad, f_in_pad, f_out_pad, out_bytes, fuse_w, budget):
    cands = _tile_candidates(n_pad)
    best = None
    for tm in cands:
        for tk in cands:
            if _spmm_bytes(tm, tk, f_in_pad, f_out_pad, out_bytes, fuse_w) > budget:
                continue
            # prefer >= 2 row blocks (v7x megacore), then biggest tiles
            key = (n_pad // tm >= 2, tm * tk, tk)
            if best is None or key > best[0]:
                best = (key, (tm, tk))
    if best is None:
        t = min(cands)
        return t, t
    return best[1]


def _rowmm_bytes(tm, f_in_pad, f_out_pad, out_bytes):
    return (2 * tm * f_in_pad * 2 + 2 * f_in_pad * f_out_pad * 2
            + 2 * tm * f_out_pad * out_bytes)


def _pick_rowmm_tile(n_pad, f_in_pad, f_out_pad, out_bytes, budget):
    cands = _tile_candidates(n_pad)
    best = None
    for tm in cands:
        if _rowmm_bytes(tm, f_in_pad, f_out_pad, out_bytes) > budget:
            continue
        key = (n_pad // tm >= 2, tm)
        if best is None or key > best[0]:
            best = (key, tm)
    return best[1] if best is not None else min(cands)


def _fused_bytes(n_pad, f_pads, n_layers):
    a = n_pad * n_pad * 2
    h = n_pad * max(f_pads) * 2
    w = sum(f_pads[i] * f_pads[i + 1] * 2 for i in range(n_layers))
    b = sum(f_pads[i + 1] * 4 for i in range(n_layers))
    o = n_pad * f_pads[-1] * 4
    work = 3 * n_pad * max(f_pads) * 4       # headroom for in-kernel temporaries
    return a + h + w + b + o + work


# ------------------------------ pallas_call wrappers ------------------------ #
def _a_block_spec(tm, tk):
    idx = lambda i, k: (i, k)
    try:
        # deeper pipelining on the only operand whose block changes every step
        return pl.BlockSpec((tm, tk), idx, pipeline_mode=pl.Buffered(3))
    except Exception:
        return pl.BlockSpec((tm, tk), idx)


def spmm(a_pad, h, bias, *, w=None, apply_relu, out_dtype, budget):
    """O = relu?((A_hat @ H) [@ W] + b); reduction grid axis last."""
    n_pad = a_pad.shape[0]
    f_in_pad = h.shape[1]
    f_out_pad = w.shape[1] if w is not None else f_in_pad
    out_bytes = jnp.dtype(out_dtype).itemsize
    fuse_w = w is not None
    tm, tk = _pick_spmm_tiles(n_pad, f_in_pad, f_out_pad, out_bytes, fuse_w, budget)

    a_spec = _a_block_spec(tm, tk)
    h_spec = pl.BlockSpec((tk, f_in_pad), lambda i, k: (k, 0))
    b_spec = pl.BlockSpec((1, f_out_pad), lambda i, k: (0, 0))
    o_spec = pl.BlockSpec((tm, f_out_pad), lambda i, k: (i, 0))

    if fuse_w:
        kernel = functools.partial(_spmm_fused_w_kernel, apply_relu=apply_relu)
        w_spec = pl.BlockSpec((f_in_pad, f_out_pad), lambda i, k: (0, 0))
        in_specs = [a_spec, h_spec, w_spec, b_spec]
        args = (a_pad, h, w, bias)
        scratch = [pltpu.VMEM((tm, f_in_pad), jnp.float32)]
    elif out_dtype == jnp.float32:
        kernel = functools.partial(_spmm_bias_f32_kernel, apply_relu=apply_relu)
        in_specs = [a_spec, h_spec, b_spec]
        args = (a_pad, h, bias)
        scratch = []                      # accumulate directly in resident o_ref
    else:
        kernel = functools.partial(_spmm_bias_kernel, apply_relu=apply_relu)
        in_specs = [a_spec, h_spec, b_spec]
        args = (a_pad, h, bias)
        scratch = [pltpu.VMEM((tm, f_out_pad), jnp.float32)]

    return pl.pallas_call(
        kernel,
        out_shape=jax.ShapeDtypeStruct((n_pad, f_out_pad), out_dtype),
        grid_spec=pltpu.PrefetchScalarGridSpec(
            num_scalar_prefetch=0,
            grid=(n_pad // tm, n_pad // tk),      # reduction axis last
            in_specs=in_specs,
            out_specs=o_spec,
            scratch_shapes=scratch,
        ),
        compiler_params=pltpu.CompilerParams(
            dimension_semantics=("parallel", "arbitrary"),
            vmem_limit_bytes=budget,
        ),
    )(*args)


def rowmm(x, w, *, out_dtype, budget):
    """Row-tiled O = X @ W (bf16 intermediate for the A@(XW) layer order)."""
    n_pad, f_in_pad = x.shape
    f_out_pad = w.shape[1]
    out_bytes = jnp.dtype(out_dtype).itemsize
    tm = _pick_rowmm_tile(n_pad, f_in_pad, f_out_pad, out_bytes, budget)
    return pl.pallas_call(
        _rowmm_kernel,
        out_shape=jax.ShapeDtypeStruct((n_pad, f_out_pad), out_dtype),
        grid_spec=pltpu.PrefetchScalarGridSpec(
            num_scalar_prefetch=0,
            grid=(n_pad // tm,),
            in_specs=[pl.BlockSpec((tm, f_in_pad), lambda i: (i, 0)),
                      pl.BlockSpec((f_in_pad, f_out_pad), lambda i: (0, 0))],
            out_specs=pl.BlockSpec((tm, f_out_pad), lambda i: (i, 0)),
        ),
        compiler_params=pltpu.CompilerParams(
            dimension_semantics=("parallel",),
            vmem_limit_bytes=budget,
        ),
    )(x, w)


def gcn_layer_tiled(a_pad, h, w_pad, b_pad, *, f_in, f_out, apply_relu, out_dtype, budget):
    if f_in < f_out:
        # (A @ X) @ W, W fused into the spmm epilogue (no AX HBM round trip).
        return spmm(a_pad, h, b_pad, w=w_pad, apply_relu=apply_relu,
                    out_dtype=out_dtype, budget=budget)
    # A @ (X @ W): small (n, f_out) intermediate kept in bf16.
    xw = rowmm(h, w_pad, out_dtype=jnp.bfloat16, budget=budget)
    return spmm(a_pad, xw, b_pad, w=None, apply_relu=apply_relu,
                out_dtype=out_dtype, budget=budget)


def gcn_forward_fused(a_pad, h0, w_pads, b_pads, dims, budget):
    n_pad = a_pad.shape[0]
    f_out_pad = w_pads[-1].shape[1]
    kernel = functools.partial(_fused_gcn_kernel, n_layers=len(w_pads), dims=tuple(dims))
    return pl.pallas_call(
        kernel,
        out_shape=jax.ShapeDtypeStruct((n_pad, f_out_pad), jnp.float32),
        compiler_params=pltpu.CompilerParams(vmem_limit_bytes=budget),
    )(a_pad, h0, *w_pads, *b_pads)


# ------------------------------ Plain-JAX glue ------------------------------ #
def normalized_adjacency(edge_index, num_nodes):
    """Dense A_hat = D^{-1/2}(A+I)D^{-1/2} matching PyG gcn_norm
    (add_remaining_self_loops: keep existing self-loop weights, sum duplicates)."""
    src, dst = edge_index[0], edge_index[1]
    a = jnp.zeros((num_nodes, num_nodes), jnp.float32).at[dst, src].add(1.0)
    diag = jnp.arange(num_nodes)
    has_self = a[diag, diag] > 0
    a = a.at[diag, diag].add(jnp.where(has_self, 0.0, 1.0))
    deg = jnp.sum(a, axis=1)
    d_inv_sqrt = jnp.where(deg > 0, 1.0 / jnp.sqrt(deg), 0.0)
    return a * d_inv_sqrt[:, None] * d_inv_sqrt[None, :]


def glorot(key, shape):
    fan_in, fan_out = shape
    limit = jnp.sqrt(6.0 / (fan_in + fan_out))
    return jax.random.uniform(key, shape, jnp.float32, -limit, limit)


def init_gcn_params(key, n_layers, in_features, hidden_features, out_features):
    dims = [in_features] + [hidden_features] * (n_layers - 1) + [out_features]
    params = []
    for i in range(n_layers):
        key, wk = jax.random.split(key)
        w = glorot(wk, (dims[i], dims[i + 1]))
        b = jnp.zeros((dims[i + 1],), jnp.float32)   # PyG GCNConv: zero bias
        params.append((w, b))
    return params


def gnn_classifier_forward(params, x, edge_index, *, force_tiled=False):
    """GNNClassifier(backbone='gcn').forward in eval mode (dropouts = identity)."""
    n, f_in0 = x.shape
    a_hat = normalized_adjacency(edge_index, n)

    n_pad = _round_up(n, LANE)
    budget = _vmem_budget_bytes()
    n_layers = len(params)
    dims = [(w.shape[0], w.shape[1]) for (w, _) in params]
    f_pads = [_round_up(f_in0, LANE)] + [_round_up(d[1], LANE) for d in dims]

    # Dominant A_hat operand in bf16 (halves HBM bytes); accumulation stays f32.
    a_pad = (jnp.zeros((n_pad, n_pad), jnp.bfloat16)
             .at[:n, :n].set(a_hat.astype(jnp.bfloat16)))
    # Activations travel as bf16, zero-padded to lane-dense widths.
    h0 = (jnp.zeros((n_pad, f_pads[0]), jnp.bfloat16)
          .at[:n, :f_in0].set(x.astype(jnp.bfloat16)))

    w_pads, b_pads = [], []
    for li, (w, b) in enumerate(params):
        f_in, f_out = w.shape
        w_p = (jnp.zeros((f_pads[li], f_pads[li + 1]), jnp.float32)
               .at[:f_in, :f_out].set(w)).astype(jnp.bfloat16)
        b_p = jnp.zeros((1, f_pads[li + 1]), jnp.float32).at[0, :f_out].set(b)
        w_pads.append(w_p)
        b_pads.append(b_p)

    if (not force_tiled) and _fused_bytes(n_pad, f_pads, n_layers) <= int(budget * 0.7):
        out = gcn_forward_fused(a_pad, h0, w_pads, b_pads, dims, budget)
    else:
        h = h0
        for li in range(n_layers):
            last = li == n_layers - 1
            h = gcn_layer_tiled(
                a_pad, h, w_pads[li], b_pads[li],
                f_in=dims[li][0], f_out=dims[li][1],
                apply_relu=not last,
                out_dtype=jnp.float32 if last else jnp.bfloat16,
                budget=budget,
            )
        out = h
    return out[:n, :dims[-1][1]]


def gcn_reference(params, x, edge_index):
    """Pure-JAX reference with the same bf16 quantization points as the kernels."""
    n = x.shape[0]
    a = normalized_adjacency(edge_index, n).astype(jnp.bfloat16)
    h = x.astype(jnp.bfloat16)
    n_layers = len(params)
    out = None
    for li, (w, b) in enumerate(params):
        wq = w.astype(jnp.bfloat16)
        if w.shape[0] < w.shape[1]:
            t = jnp.dot(a, h, preferred_element_type=jnp.float32).astype(jnp.bfloat16)
            z = jnp.dot(t, wq, preferred_element_type=jnp.float32) + b[None, :]
        else:
            t = jnp.dot(h, wq, preferred_element_type=jnp.float32).astype(jnp.bfloat16)
            z = jnp.dot(a, t, preferred_element_type=jnp.float32) + b[None, :]
        if li < n_layers - 1:
            h = jnp.maximum(z, 0.0).astype(jnp.bfloat16)
        else:
            out = z
    return out


# --------------------------------- Driver ----------------------------------- #
def _make_graph(key, n, f_in, e):
    kx, ks, kd = jax.random.split(key, 3)
    x = jax.random.normal(kx, (n, f_in), jnp.float32)
    src = jax.random.randint(ks, (e,), 0, n)
    dst = jax.random.randint(kd, (e,), 0, n)
    edge_index = jnp.stack([jnp.concatenate([src, dst]),
                            jnp.concatenate([dst, src])], axis=0)  # undirected
    return x, edge_index


if __name__ == "__main__":
    N, F_IN, F_HID, F_OUT = 64, 16, 32, 8
    N_LAYERS = 3

    key = jax.random.PRNGKey(0)
    kg1, kg2, kp = jax.random.split(key, 3)

    params = init_gcn_params(kp, N_LAYERS, F_IN, F_HID, F_OUT)

    # 1) Small graph -> fully-fused single-kernel path.
    x1, ei1 = _make_graph(kg1, N, F_IN, 128)
    out1 = gnn_classifier_forward(params, x1, ei1)
    jax.block_until_ready(out1)
    assert out1.shape == (N, F_OUT), out1.shape
    assert bool(jnp.all(jnp.isfinite(out1)))
    ref1 = gcn_reference(params, x1, ei1)
    assert bool(jnp.allclose(out1, ref1, atol=2e-2, rtol=2e-2))

    # 2) Larger graph, forced through the tiled per-layer path
    #    (exercises the K-reduction grid, fused-W epilogue, rowmm + bias spmm).
    N2 = 300
    x2, ei2 = _make_graph(kg2, N2, F_IN, 600)
    out2 = gnn_classifier_forward(params, x2, ei2, force_tiled=True)
    jax.block_until_ready(out2)
    assert out2.shape == (N2, F_OUT), out2.shape
    assert bool(jnp.all(jnp.isfinite(out2)))
    ref2 = gcn_reference(params, x2, ei2)
    assert bool(jnp.allclose(out2, ref2, atol=2e-2, rtol=2e-2))

    print("KERNEL_OK")
</pallas_src>

<mosaic_0001>
module attributes {stable_mosaic.version = 11 : i64} {
  func.func @_fused_gcn_kernel(%arg0: memref<128x128xbf16, #tpu.memory_space<vmem>>, %arg1: memref<128x128xbf16, #tpu.memory_space<vmem>>, %arg2: memref<128x128xbf16, #tpu.memory_space<vmem>>, %arg3: memref<128x128xbf16, #tpu.memory_space<vmem>>, %arg4: memref<128x128xbf16, #tpu.memory_space<vmem>>, %arg5: memref<1x128xf32, #tpu.memory_space<vmem>>, %arg6: memref<1x128xf32, #tpu.memory_space<vmem>>, %arg7: memref<1x128xf32, #tpu.memory_space<vmem>>, %arg8: memref<128x128xf32, #tpu.memory_space<vmem>>) attributes {dimension_semantics = [], scalar_prefetch = 0 : i64, scratch_operands = 0 : i64, tpu.core_type = #tpu.core_type<tc>} {
    %c0 = arith.constant 0 : index
    %c0_0 = arith.constant 0 : index
    %0 = vector.load %arg0[%c0, %c0_0] : memref<128x128xbf16, #tpu.memory_space<vmem>>, vector<128x128xbf16>
    %c0_1 = arith.constant 0 : index
    %c0_2 = arith.constant 0 : index
    %1 = vector.load %arg1[%c0_1, %c0_2] : memref<128x128xbf16, #tpu.memory_space<vmem>>, vector<128x128xbf16>
    %c0_3 = arith.constant 0 : index
    %c0_4 = arith.constant 0 : index
    %2 = vector.load %arg2[%c0_3, %c0_4] : memref<128x128xbf16, #tpu.memory_space<vmem>>, vector<128x128xbf16>
    %c0_5 = arith.constant 0 : index
    %c0_6 = arith.constant 0 : index
    %3 = vector.load %arg5[%c0_5, %c0_6] : memref<1x128xf32, #tpu.memory_space<vmem>>, vector<1x128xf32>
    %cst = arith.constant dense<0.000000e+00> : vector<128x128xf32>
    %4 = tpu.matmul %0, %1, %cst {dimension_numbers = #tpu.dot_dimension_numbers<[1], [0], [0], [1], [0, 0, 1, 1], [], []>} : vector<128x128xbf16>, vector<128x128xbf16>, vector<128x128xf32> -> vector<128x128xf32>
    %5 = arith.truncf %4 : vector<128x128xf32> to vector<128x128xbf16>
    %cst_7 = arith.constant dense<0.000000e+00> : vector<128x128xf32>
    %6 = tpu.matmul %5, %2, %cst_7 {dimension_numbers = #tpu.dot_dimension_numbers<[1], [0], [0], [1], [0, 0, 1, 1], [], []>} : vector<128x128xbf16>, vector<128x128xbf16>, vector<128x128xf32> -> vector<128x128xf32>
    %7 = vector.broadcast %3 : vector<1x128xf32> to vector<128x128xf32>
    %8 = arith.addf %6, %7 : vector<128x128xf32>
    %cst_8 = arith.constant 0.000000e+00 : f32
    %9 = vector.broadcast %cst_8 : f32 to vector<128x128xf32>
    %10 = arith.maximumf %8, %9 : vector<128x128xf32>
    %11 = arith.truncf %10 : vector<128x128xf32> to vector<128x128xbf16>
    %c0_9 = arith.constant 0 : index
    %c0_10 = arith.constant 0 : index
    %12 = vector.load %arg3[%c0_9, %c0_10] : memref<128x128xbf16, #tpu.memory_space<vmem>>, vector<128x128xbf16>
    %c0_11 = arith.constant 0 : index
    %c0_12 = arith.constant 0 : index
    %13 = vector.load %arg6[%c0_11, %c0_12] : memref<1x128xf32, #tpu.memory_space<vmem>>, vector<1x128xf32>
    %cst_13 = arith.constant dense<0.000000e+00> : vector<128x128xf32>
    %14 = tpu.matmul %11, %12, %cst_13 {dimension_numbers = #tpu.dot_dimension_numbers<[1], [0], [0], [1], [0, 0, 1, 1], [], []>} : vector<128x128xbf16>, vector<128x128xbf16>, vector<128x128xf32> -> vector<128x128xf32>
    %15 = arith.truncf %14 : vector<128x128xf32> to vector<128x128xbf16>
    %cst_14 = arith.constant dense<0.000000e+00> : vector<128x128xf32>
    %16 = tpu.matmul %0, %15, %cst_14 {dimension_numbers = #tpu.dot_dimension_numbers<[1], [0], [0], [1], [0, 0, 1, 1], [], []>} : vector<128x128xbf16>, vector<128x128xbf16>, vector<128x128xf32> -> vector<128x128xf32>
    %17 = vector.broadcast %13 : vector<1x128xf32> to vector<128x128xf32>
    %18 = arith.addf %16, %17 : vector<128x128xf32>
    %cst_15 = arith.constant 0.000000e+00 : f32
    %19 = vector.broadcast %cst_15 : f32 to vector<128x128xf32>
    %20 = arith.maximumf %18, %19 : vector<128x128xf32>
    %21 = arith.truncf %20 : vector<128x128xf32> to vector<128x128xbf16>
    %c0_16 = arith.constant 0 : index
    %c0_17 = arith.constant 0 : index
    %22 = vector.load %arg4[%c0_16, %c0_17] : memref<128x128xbf16, #tpu.memory_space<vmem>>, vector<128x128xbf16>
    %c0_18 = arith.constant 0 : index
    %c0_19 = arith.constant 0 : index
    %23 = vector.load %arg7[%c0_18, %c0_19] : memref<1x128xf32, #tpu.memory_space<vmem>>, vector<1x128xf32>
    %cst_20 = arith.constant dense<0.000000e+00> : vector<128x128xf32>
    %24 = tpu.matmul %21, %22, %cst_20 {dimension_numbers = #tpu.dot_dimension_numbers<[1], [0], [0], [1], [0, 0, 1, 1], [], []>} : vector<128x128xbf16>, vector<128x128xbf16>, vector<128x128xf32> -> vector<128x128xf32>
    %25 = arith.truncf %24 : vector<128x128xf32> to vector<128x128xbf16>
    %cst_21 = arith.constant dense<0.000000e+00> : vector<128x128xf32>
    %26 = tpu.matmul %0, %25, %cst_21 {dimension_numbers = #tpu.dot_dimension_numbers<[1], [0], [0], [1], [0, 0, 1, 1], [], []>} : vector<128x128xbf16>, vector<128x128xbf16>, vector<128x128xf32> -> vector<128x128xf32>
    %27 = vector.broadcast %23 : vector<1x128xf32> to vector<128x128xf32>
    %28 = arith.addf %26, %27 : vector<128x128xf32>
    %c0_22 = arith.constant 0 : index
    %c0_23 = arith.constant 0 : index
    %29 = vector.load %arg8[%c0_22, %c0_23] : memref<128x128xf32, #tpu.memory_space<vmem>>, vector<128x128xf32>
    tpu.vector_store %arg8[%c0_22, %c0_23], %28 {strides = array<i32>} : memref<128x128xf32, #tpu.memory_space<vmem>>, vector<128x128xf32>,
    return
  }
}

</mosaic_0001>

<llo_original>
// kernel: tpu_custom_call.1
$region0: #{tpu_custom_call.1}
  #allocation0 [shape = 'u32[]', space=smem, size = 0x4, offset = 0x4, fixed_abs, tag = 'smem constant byte address 0x4 - core index']
  #allocation1 [shape = 'u32[72,128]{1,0:T(1,128)}', space=vmem, size = 0x9000, scoped, tag = 'internal scratch']
  %s0 = inlined_call_operand.hbm [shape: bf16[128,128], index: 0, kind: input, shape index: {}]
  %s1 = inlined_call_operand.hbm [shape: bf16[128,128], index: 1, kind: input, shape index: {}]
  %s2 = inlined_call_operand.hbm [shape: bf16[128,128], index: 2, kind: input, shape index: {}]
  %s3 = inlined_call_operand.hbm [shape: bf16[128,128], index: 3, kind: input, shape index: {}]
  %s4 = inlined_call_operand.hbm [shape: bf16[128,128], index: 4, kind: input, shape index: {}]
  %s5 = inlined_call_operand.vmem [shape: f32[1,128], index: 5, kind: input, shape index: {}]
  %s6 = inlined_call_operand.vmem [shape: f32[1,128], index: 6, kind: input, shape index: {}]
  %s7 = inlined_call_operand.vmem [shape: f32[1,128], index: 7, kind: input, shape index: {}]
  %s8 = inlined_call_operand.hbm [shape: f32[128,128], index: 8, kind: output, shape index: {}]
  %s9 = sld [smem:[#allocation0]]
  $region62: #{tpu_custom_call.1} parent=0
    _
  %s11 = ssub.s32 1, %s9
  %s12 = scalar_select 0, %s11, %s9
  $region1: #{tpu_custom_call.1} parent=0
    #allocation2 [shape = 'u8[32768]{0}', space=vmem, size = 0x8000, scoped, tag = 'input window, operand 0, single buffered']
    #allocation3 [shape = 's32[1]{0}', space=sflag, size = 0x4, scoped, tag = 'scoped memory for tpu_custom_call.1']
    #allocation4 [shape = 's32[1]{0}', space=sflag, size = 0x4, scoped, tag = 'scoped memory for tpu_custom_call.1']
    #allocation5 [shape = 'u8[32768]{0}', space=vmem, size = 0x8000, scoped, tag = 'input window, operand 1, single buffered']
    #allocation6 [shape = 's32[1]{0}', space=sflag, size = 0x4, scoped, tag = 'scoped memory for tpu_custom_call.1']
    #allocation7 [shape = 'u8[32768]{0}', space=vmem, size = 0x8000, scoped, tag = 'input window, operand 2, single buffered']
    #allocation8 [shape = 'u8[32768]{0}', space=vmem, size = 0x8000, scoped, tag = 'input window, operand 3, single buffered']
    #allocation9 [shape = 's32[1]{0}', space=sflag, size = 0x4, scoped, tag = 'scoped memory for tpu_custom_call.1']
    #allocation10 [shape = 'u8[32768]{0}', space=vmem, size = 0x8000, scoped, tag = 'input window, operand 4, single buffered']
    #allocation11 [shape = 'u8[65536]{0}', space=vmem, size = 0x10000, scoped, tag = 'output window, operand 0, single buffered']
    %13 = vsyncpa [#allocation3], 0
    %14 = vsyncpa [#allocation6], 0
    %15 = vsyncpa [#allocation9], 0
    %16 = vsyncpa [#allocation4], 0
    // Predicated region
    $region2: #{tpu_custom_call.1} parent=1 // pred_check
      _
    $region3: #{tpu_custom_call.1} parent=1 // pred_check_branch
      %18 = sbr.rel (0) target = $region5
    $region4: #{tpu_custom_call.1} parent=1 // pred_region
      %20 = vsyncadd [#allocation3], 0
      %s21 = sshll.u32 %s0, 4
      %s22 = int_to_ptr.hbm [resolvable:$true] %s21
      %s23 = sshll.u32 [#allocation2], 4
      %s24 = int_to_ptr.vmem [resolvable:$true] %s23
      %29 = dma.hbm_to_vmem [thread:$0]  %s22, 1024, %s24, [#allocation3], 64, 64, 4
    $region5: #{tpu_custom_call.1} parent=1 // pred_fallthru
      _
    // Predicated region
    $region6: #{tpu_custom_call.1} parent=1 // pred_check
      _
    $region7: #{tpu_custom_call.1} parent=1 // pred_check_branch
      %31 = sbr.rel (0) target = $region9
    $region8: #{tpu_custom_call.1} parent=1 // pred_region
      %33 = vsyncadd [#allocation6], 0
      %s34 = sshll.u32 %s1, 4
      %s35 = int_to_ptr.hbm [resolvable:$true] %s34
      %s36 = sshll.u32 [#allocation5], 4
      %s37 = int_to_ptr.vmem [resolvable:$true] %s36
      %42 = dma.hbm_to_vmem [thread:$0]  %s35, 1024, %s37, [#allocation6], 64, 64, 4
    $region9: #{tpu_custom_call.1} parent=1 // pred_fallthru
      _
    // Predicated region
    $region10: #{tpu_custom_call.1} parent=1 // pred_check
      _
    $region11: #{tpu_custom_call.1} parent=1 // pred_check_branch
      %44 = sbr.rel (0) target = $region13
    $region12: #{tpu_custom_call.1} parent=1 // pred_region
      %46 = vsyncadd [#allocation6], 0
      %s47 = sshll.u32 %s2, 4
      %s48 = int_to_ptr.hbm [resolvable:$true] %s47
      %s49 = sshll.u32 [#allocation7], 4
      %s50 = int_to_ptr.vmem [resolvable:$true] %s49
      %55 = dma.hbm_to_vmem [thread:$0]  %s48, 1024, %s50, [#allocation6], 64, 64, 4
    $region13: #{tpu_custom_call.1} parent=1 // pred_fallthru
      _
    // Predicated region
    $region14: #{tpu_custom_call.1} parent=1 // pred_check
      _
    $region15: #{tpu_custom_call.1} parent=1 // pred_check_branch
      %57 = sbr.rel (0) target = $region17
    $region16: #{tpu_custom_call.1} parent=1 // pred_region
      %59 = vsyncadd [#allocation9], 0
      %s60 = sshll.u32 %s3, 4
      %s61 = int_to_ptr.hbm [resolvable:$true] %s60
      %s62 = sshll.u32 [#allocation8], 4
      %s63 = int_to_ptr.vmem [resolvable:$true] %s62
      %68 = dma.hbm_to_vmem [thread:$0]  %s61, 1024, %s63, [#allocation9], 64, 64, 4
    $region17: #{tpu_custom_call.1} parent=1 // pred_fallthru
      _
    // Predicated region
    $region18: #{tpu_custom_call.1} parent=1 // pred_check
      _
    $region19: #{tpu_custom_call.1} parent=1 // pred_check_branch
      %70 = sbr.rel (0) target = $region21
    $region20: #{tpu_custom_call.1} parent=1 // pred_region
      %72 = vsyncadd [#allocation9], 0
      %s73 = sshll.u32 %s4, 4
      %s74 = int_to_ptr.hbm [resolvable:$true] %s73
      %s75 = sshll.u32 [#allocation10], 4
      %s76 = int_to_ptr.vmem [resolvable:$true] %s75
      %81 = dma.hbm_to_vmem [thread:$0]  %s74, 1024, %s76, [#allocation9], 64, 64, 4
    $region21: #{tpu_custom_call.1} parent=1 // pred_fallthru
      _
    // Predicated region
    $region22: #{tpu_custom_call.1} parent=1 // pred_check
      _
    $region23: #{tpu_custom_call.1} parent=1 // pred_check_branch
      %83 = sbr.rel (0) target = $region25
    $region24: #{tpu_custom_call.1} parent=1 // pred_region
      _
    $region25: #{tpu_custom_call.1} parent=1 // pred_fallthru
      _
    // Predicated region
    $region26: #{tpu_custom_call.1} parent=1 // pred_check
      _
    $region27: #{tpu_custom_call.1} parent=1 // pred_check_branch
      %85 = sbr.rel (0) target = $region29
    $region28: #{tpu_custom_call.1} parent=1 // pred_region
      _
    $region29: #{tpu_custom_call.1} parent=1 // pred_fallthru
      _
    // Predicated region
    $region30: #{tpu_custom_call.1} parent=1 // pred_check
      _
    $region31: #{tpu_custom_call.1} parent=1 // pred_check_branch
      %87 = sbr.rel (0) target = $region33
    $region32: #{tpu_custom_call.1} parent=1 // pred_region
      _
    $region33: #{tpu_custom_call.1} parent=1 // pred_fallthru
      _
    // Predicated region
    $region34: #{tpu_custom_call.1} parent=1 // pred_check
      _
    $region35: #{tpu_custom_call.1} parent=1 // pred_check_branch
      %89 = sbr.rel (0) target = $region37
    $region36: #{tpu_custom_call.1} parent=1 // pred_region
      %91 = dma.done [#allocation3], 1024
    $region37: #{tpu_custom_call.1} parent=1 // pred_fallthru
      _
    // Predicated region
    $region38: #{tpu_custom_call.1} parent=1 // pred_check
      _
    $region39: #{tpu_custom_call.1} parent=1 // pred_check_branch
      %93 = sbr.rel (0) target = $region41
    $region40: #{tpu_custom_call.1} parent=1 // pred_region
      %95 = dma.done [#allocation6], 1024
    $region41: #{tpu_custom_call.1} parent=1 // pred_fallthru
      _
    // Predicated region
    $region42: #{tpu_custom_call.1} parent=1 // pred_check
      _
    $region43: #{tpu_custom_call.1} parent=1 // pred_check_branch
      %97 = sbr.rel (0) target = $region45
    $region44: #{tpu_custom_call.1} parent=1 // pred_region
      %99 = dma.done [#allocation6], 1024
    $region45: #{tpu_custom_call.1} parent=1 // pred_fallthru
      _
    // Predicated region
    $region46: #{tpu_custom_call.1} parent=1 // pred_check
      _
    $region47: #{tpu_custom_call.1} parent=1 // pred_check_branch
      %101 = sbr.rel (0) target = $region49
    $region48: #{tpu_custom_call.1} parent=1 // pred_region
      %103 = dma.done [#allocation9], 1024
    $region49: #{tpu_custom_call.1} parent=1 // pred_fallthru
      _
    // Predicated region
    $region50: #{tpu_custom_call.1} parent=1 // pred_check
      _
    $region51: #{tpu_custom_call.1} parent=1 // pred_check_branch
      %105 = sbr.rel (0) target = $region53
    $region52: #{tpu_custom_call.1} parent=1 // pred_region
      %107 = dma.done [#allocation9], 1024
    $region53: #{tpu_custom_call.1} parent=1 // pred_fallthru
      _
    %v108 = vld [vmem:[#allocation2] sm:$0xf]
    %v109 = vld [vmem:[#allocation2 + $0x4] sm:$0xf]
    %v110 = vld [vmem:[#allocation2 + $0x8] sm:$0xf]
    %v111 = vld [vmem:[#allocation2 + $0xc] sm:$0xf]
    %v112 = vld [vmem:[#allocation2 + $0x10] sm:$0xf]
    %v113 = vld [vmem:[#allocation2 + $0x14] sm:$0xf]
    %v114 = vld [vmem:[#allocation2 + $0x18] sm:$0xf]
    %v115 = vld [vmem:[#allocation2 + $0x1c] sm:$0xf]
    %v116 = vld [vmem:[#allocation2 + $0x20] sm:$0xf]
    %v117 = vld [vmem:[#allocation2 + $0x24] sm:$0xf]
    %v118 = vld [vmem:[#allocation2 + $0x28] sm:$0xf]
    %v119 = vld [vmem:[#allocation2 + $0x2c] sm:$0xf]
    %v120 = vld [vmem:[#allocation2 + $0x30] sm:$0xf]
    %v121 = vld [vmem:[#allocation2 + $0x34] sm:$0xf]
    %v122 = vld [vmem:[#allocation2 + $0x38] sm:$0xf]
    %v123 = vld [vmem:[#allocation2 + $0x3c] sm:$0xf]
    %v124 = vld [vmem:[#allocation5] sm:$0xf]
    %v125 = vld [vmem:[#allocation5 + $0x4] sm:$0xf]
    %v126 = vld [vmem:[#allocation5 + $0x8] sm:$0xf]
    %v127 = vld [vmem:[#allocation5 + $0xc] sm:$0xf]
    %v128 = vld [vmem:[#allocation5 + $0x10] sm:$0xf]
    %v129 = vld [vmem:[#allocation5 + $0x14] sm:$0xf]
    %v130 = vld [vmem:[#allocation5 + $0x18] sm:$0xf]
    %v131 = vld [vmem:[#allocation5 + $0x1c] sm:$0xf]
    %v132 = vld [vmem:[#allocation5 + $0x20] sm:$0xf]
    %v133 = vld [vmem:[#allocation5 + $0x24] sm:$0xf]
    %v134 = vld [vmem:[#allocation5 + $0x28] sm:$0xf]
    %v135 = vld [vmem:[#allocation5 + $0x2c] sm:$0xf]
    %v136 = vld [vmem:[#allocation5 + $0x30] sm:$0xf]
    %v137 = vld [vmem:[#allocation5 + $0x34] sm:$0xf]
    %v138 = vld [vmem:[#allocation5 + $0x38] sm:$0xf]
    %v139 = vld [vmem:[#allocation5 + $0x3c] sm:$0xf]
    %v140 = vld [vmem:[#allocation7] sm:$0xf]
    %v141 = vld [vmem:[#allocation7 + $0x4] sm:$0xf]
    %v142 = vld [vmem:[#allocation7 + $0x8] sm:$0xf]
    %v143 = vld [vmem:[#allocation7 + $0xc] sm:$0xf]
    %v144 = vld [vmem:[#allocation7 + $0x10] sm:$0xf]
    %v145 = vld [vmem:[#allocation7 + $0x14] sm:$0xf]
    %v146 = vld [vmem:[#allocation7 + $0x18] sm:$0xf]
    %v147 = vld [vmem:[#allocation7 + $0x1c] sm:$0xf]
    %v148 = vld [vmem:[#allocation7 + $0x20] sm:$0xf]
    %v149 = vld [vmem:[#allocation7 + $0x24] sm:$0xf]
    %v150 = vld [vmem:[#allocation7 + $0x28] sm:$0xf]
    %v151 = vld [vmem:[#allocation7 + $0x2c] sm:$0xf]
    %v152 = vld [vmem:[#allocation7 + $0x30] sm:$0xf]
    %v153 = vld [vmem:[#allocation7 + $0x34] sm:$0xf]
    %v154 = vld [vmem:[#allocation7 + $0x38] sm:$0xf]
    %v155 = vld [vmem:[#allocation7 + $0x3c] sm:$0xf]
    %v156 = vld [vmem:[%s5] sm:$0x1]
    %v173 = vunpack.c.l.b16 %v108
    %v174 = vunpack.c.l.b16 %v109
    %v175 = vunpack.c.l.b16 %v110
    %v176 = vunpack.c.l.b16 %v111
    %v177 = vunpack.c.l.b16 %v112
    %v178 = vunpack.c.l.b16 %v113
    %v179 = vunpack.c.l.b16 %v114
    %v180 = vunpack.c.l.b16 %v115
    %v181 = vunpack.c.l.b16 %v116
    %v182 = vunpack.c.l.b16 %v117
    %v183 = vunpack.c.l.b16 %v118
    %v184 = vunpack.c.l.b16 %v119
    %v185 = vunpack.c.l.b16 %v120
    %v186 = vunpack.c.l.b16 %v121
    %v187 = vunpack.c.l.b16 %v122
    %v188 = vunpack.c.l.b16 %v123
    %v189 = vpack.c.b16 %v174, %v173
    %v190 = vpack.c.b16 %v176, %v175
    %v191 = vpack.c.b16 %v178, %v177
    %v192 = vpack.c.b16 %v180, %v179
    %v193 = vpack.c.b16 %v182, %v181
    %v194 = vpack.c.b16 %v184, %v183
    %v195 = vpack.c.b16 %v186, %v185
    %v196 = vpack.c.b16 %v188, %v187
    %v221 = vunpack.c.l.b16 %v124
    %v222 = vunpack.c.l.b16 %v125
    %v223 = vunpack.c.l.b16 %v126
    %v224 = vunpack.c.l.b16 %v127
    %v225 = vunpack.c.l.b16 %v128
    %v226 = vunpack.c.l.b16 %v129
    %v227 = vunpack.c.l.b16 %v130
    %v228 = vunpack.c.l.b16 %v131
    %v229 = vunpack.c.l.b16 %v132
    %v230 = vunpack.c.l.b16 %v133
    %v231 = vunpack.c.l.b16 %v134
    %v232 = vunpack.c.l.b16 %v135
    %v233 = vunpack.c.l.b16 %v136
    %v234 = vunpack.c.l.b16 %v137
    %v235 = vunpack.c.l.b16 %v138
    %v236 = vunpack.c.l.b16 %v139
    %v237 = vpack.c.b16 %v222, %v221
    %v238 = vpack.c.b16 %v224, %v223
    %v239 = vpack.c.b16 %v226, %v225
    %v240 = vpack.c.b16 %v228, %v227
    %v241 = vpack.c.b16 %v230, %v229
    %v242 = vpack.c.b16 %v232, %v231
    %v243 = vpack.c.b16 %v234, %v233
    %v244 = vpack.c.b16 %v236, %v235
    %253 = vmatpush.bf16.msra.mxu0 %v244
    %254 = vmatpush.bf16.msra.mxu0 %v243
    %255 = vmatpush.bf16.msra.mxu0 %v242
    %256 = vmatpush.bf16.msra.mxu0 %v241
    %257 = vmatpush.bf16.msra.mxu0 %v240
    %258 = vmatpush.bf16.msra.mxu0 %v239
    %259 = vmatpush.bf16.msra.mxu0 %v238
    %260 = vmatpush.bf16.msra.mxu0 %v237
    %261 = vmatmul.bf16.gmra.mxu0 %v189
    %v262 = vpop.f32.mrf.mxu0
    %v263 = vadd.f32 0.0, %v262
    %v264 = vpop.f32.mrf.mxu0
    %v265 = vadd.f32 0.0, %v264
    %266 = vmatmul.bf16.gmra.mxu0 %v190
    %v267 = vpop.f32.mrf.mxu0
    %v268 = vadd.f32 0.0, %v267
    %v269 = vpop.f32.mrf.mxu0
    %v270 = vadd.f32 0.0, %v269
    %271 = vmatmul.bf16.gmra.mxu0 %v191
    %v272 = vpop.f32.mrf.mxu0
    %v273 = vadd.f32 0.0, %v272
    %v274 = vpop.f32.mrf.mxu0
    %v275 = vadd.f32 0.0, %v274
    %276 = vmatmul.bf16.gmra.mxu0 %v192
    %v277 = vpop.f32.mrf.mxu0
    %v278 = vadd.f32 0.0, %v277
    %v279 = vpop.f32.mrf.mxu0
    %v280 = vadd.f32 0.0, %v279
    %281 = vmatmul.bf16.gmra.mxu0 %v193
    %v282 = vpop.f32.mrf.mxu0
    %v283 = vadd.f32 0.0, %v282
    %v284 = vpop.f32.mrf.mxu0
    %v285 = vadd.f32 0.0, %v284
    %286 = vmatmul.bf16.gmra.mxu0 %v194
    %v287 = vpop.f32.mrf.mxu0
    %v288 = vadd.f32 0.0, %v287
    %v289 = vpop.f32.mrf.mxu0
    %v290 = vadd.f32 0.0, %v289
    %291 = vmatmul.bf16.gmra.mxu0 %v195
    %v292 = vpop.f32.mrf.mxu0
    %v293 = vadd.f32 0.0, %v292
    %v294 = vpop.f32.mrf.mxu0
    %v295 = vadd.f32 0.0, %v294
    %296 = vmatmul.bf16.gmra.mxu0 %v196
    %v297 = vpop.f32.mrf.mxu0
    %v298 = vadd.f32 0.0, %v297
    %v299 = vpop.f32.mrf.mxu0
    %v300 = vadd.f32 0.0, %v299
    %301 = vdwg.mxu0
    %v302 = vpack.c.bf16 %v265, %v263
    %v303 = vpack.c.bf16 %v270, %v268
    %v304 = vpack.c.bf16 %v275, %v273
    %v305 = vpack.c.bf16 %v280, %v278
    %v306 = vpack.c.bf16 %v285, %v283
    %v307 = vpack.c.bf16 %v290, %v288
    %v308 = vpack.c.bf16 %v295, %v293
    %v309 = vpack.c.bf16 %v300, %v298
    %v311 = vperm.slane %v156, 0
    %v329 = vunpack.c.l.b16 %v140
    %v330 = vunpack.c.l.b16 %v141
    %v331 = vunpack.c.l.b16 %v142
    %v332 = vunpack.c.l.b16 %v143
    %v333 = vunpack.c.l.b16 %v144
    %v334 = vunpack.c.l.b16 %v145
    %v335 = vunpack.c.l.b16 %v146
    %v336 = vunpack.c.l.b16 %v147
    %v337 = vunpack.c.l.b16 %v148
    %v338 = vunpack.c.l.b16 %v149
    %v339 = vunpack.c.l.b16 %v150
    %v340 = vunpack.c.l.b16 %v151
    %v341 = vunpack.c.l.b16 %v152
    %v342 = vunpack.c.l.b16 %v153
    %v343 = vunpack.c.l.b16 %v154
    %v344 = vunpack.c.l.b16 %v155
    %v345 = vpack.c.b16 %v330, %v329
    %v346 = vpack.c.b16 %v332, %v331
    %v347 = vpack.c.b16 %v334, %v333
    %v348 = vpack.c.b16 %v336, %v335
    %v349 = vpack.c.b16 %v338, %v337
    %v350 = vpack.c.b16 %v340, %v339
    %v351 = vpack.c.b16 %v342, %v341
    %v352 = vpack.c.b16 %v344, %v343
    %361 = vmatpush.bf16.msra.mxu0 %v352
    %362 = vmatpush.bf16.msra.mxu0 %v351
    %363 = vmatpush.bf16.msra.mxu0 %v350
    %364 = vmatpush.bf16.msra.mxu0 %v349
    %365 = vmatpush.bf16.msra.mxu0 %v348
    %366 = vmatpush.bf16.msra.mxu0 %v347
    %367 = vmatpush.bf16.msra.mxu0 %v346
    %368 = vmatpush.bf16.msra.mxu0 %v345
    %369 = vmatmul.bf16.gmra.mxu0 %v302
    %v370 = vpop.f32.mrf.mxu0
    %v371 = vadd.f32 %v311, %v370
    %v372 = vpop.f32.mrf.mxu0
    %v373 = vadd.f32 %v311, %v372
    %374 = vmatmul.bf16.gmra.mxu0 %v303
    %v375 = vpop.f32.mrf.mxu0
    %v376 = vadd.f32 %v311, %v375
    %v377 = vpop.f32.mrf.mxu0
    %v378 = vadd.f32 %v311, %v377
    %379 = vmatmul.bf16.gmra.mxu0 %v304
    %v380 = vpop.f32.mrf.mxu0
    %v381 = vadd.f32 %v311, %v380
    %v382 = vpop.f32.mrf.mxu0
    %v383 = vadd.f32 %v311, %v382
    %384 = vmatmul.bf16.gmra.mxu0 %v305
    %v385 = vpop.f32.mrf.mxu0
    %v386 = vadd.f32 %v311, %v385
    %v387 = vpop.f32.mrf.mxu0
    %v388 = vadd.f32 %v311, %v387
    %389 = vmatmul.bf16.gmra.mxu0 %v306
    %v390 = vpop.f32.mrf.mxu0
    %v391 = vadd.f32 %v311, %v390
    %v392 = vpop.f32.mrf.mxu0
    %v393 = vadd.f32 %v311, %v392
    %394 = vmatmul.bf16.gmra.mxu0 %v307
    %v395 = vpop.f32.mrf.mxu0
    %v396 = vadd.f32 %v311, %v395
    %v397 = vpop.f32.mrf.mxu0
    %v398 = vadd.f32 %v311, %v397
    %399 = vmatmul.bf16.gmra.mxu0 %v308
    %v400 = vpop.f32.mrf.mxu0
    %v401 = vadd.f32 %v311, %v400
    %v402 = vpop.f32.mrf.mxu0
    %v403 = vadd.f32 %v311, %v402
    %404 = vmatmul.bf16.gmra.mxu0 %v309
    %v405 = vpop.f32.mrf.mxu0
    %v406 = vadd.f32 %v311, %v405
    %v407 = vpop.f32.mrf.mxu0
    %v408 = vadd.f32 %v311, %v407
    %409 = vdwg.mxu0
    %v410 = vmax.f32 %v371, 0.0
    %v411 = vmax.f32 %v373, 0.0
    %v412 = vmax.f32 %v376, 0.0
    %v413 = vmax.f32 %v378, 0.0
    %v414 = vmax.f32 %v381, 0.0
    %v415 = vmax.f32 %v383, 0.0
    %v416 = vmax.f32 %v386, 0.0
    %v417 = vmax.f32 %v388, 0.0
    %v418 = vmax.f32 %v391, 0.0
    %v419 = vmax.f32 %v393, 0.0
    %v420 = vmax.f32 %v396, 0.0
    %v421 = vmax.f32 %v398, 0.0
    %v422 = vmax.f32 %v401, 0.0
    %v423 = vmax.f32 %v403, 0.0
    %v424 = vmax.f32 %v406, 0.0
    %v425 = vmax.f32 %v408, 0.0
    %v426 = vpack.c.bf16 %v411, %v410
    %v427 = vpack.c.bf16 %v413, %v412
    %v428 = vpack.c.bf16 %v415, %v414
    %v429 = vpack.c.bf16 %v417, %v416
    %v430 = vpack.c.bf16 %v419, %v418
    %v431 = vpack.c.bf16 %v421, %v420
    %v432 = vpack.c.bf16 %v423, %v422
    %v433 = vpack.c.bf16 %v425, %v424
    %v434 = vld [vmem:[#allocation8] sm:$0xf]
    %v435 = vld [vmem:[#allocation8 + $0x4] sm:$0xf]
    %v436 = vld [vmem:[#allocation8 + $0x8] sm:$0xf]
    %v437 = vld [vmem:[#allocation8 + $0xc] sm:$0xf]
    %v438 = vld [vmem:[#allocation8 + $0x10] sm:$0xf]
    %v439 = vld [vmem:[#allocation8 + $0x14] sm:$0xf]
    %v440 = vld [vmem:[#allocation8 + $0x18] sm:$0xf]
    %v441 = vld [vmem:[#allocation8 + $0x1c] sm:$0xf]
    %v442 = vld [vmem:[#allocation8 + $0x20] sm:$0xf]
    %v443 = vld [vmem:[#allocation8 + $0x24] sm:$0xf]
    %v444 = vld [vmem:[#allocation8 + $0x28] sm:$0xf]
    %v445 = vld [vmem:[#allocation8 + $0x2c] sm:$0xf]
    %v446 = vld [vmem:[#allocation8 + $0x30] sm:$0xf]
    %v447 = vld [vmem:[#allocation8 + $0x34] sm:$0xf]
    %v448 = vld [vmem:[#allocation8 + $0x38] sm:$0xf]
    %v449 = vld [vmem:[#allocation8 + $0x3c] sm:$0xf]
    %v450 = vld [vmem:[%s6] sm:$0x1]
    %v467 = vunpack.c.l.b16 %v434
    %v468 = vunpack.c.l.b16 %v435
    %v469 = vunpack.c.l.b16 %v436
    %v470 = vunpack.c.l.b16 %v437
    %v471 = vunpack.c.l.b16 %v438
    %v472 = vunpack.c.l.b16 %v439
    %v473 = vunpack.c.l.b16 %v440
    %v474 = vunpack.c.l.b16 %v441
    %v475 = vunpack.c.l.b16 %v442
    %v476 = vunpack.c.l.b16 %v443
    %v477 = vunpack.c.l.b16 %v444
    %v478 = vunpack.c.l.b16 %v445
    %v479 = vunpack.c.l.b16 %v446
    %v480 = vunpack.c.l.b16 %v447
    %v481 = vunpack.c.l.b16 %v448
    %v482 = vunpack.c.l.b16 %v449
    %v483 = vpack.c.b16 %v468, %v467
    %v484 = vpack.c.b16 %v470, %v469
    %v485 = vpack.c.b16 %v472, %v471
    %v486 = vpack.c.b16 %v474, %v473
    %v487 = vpack.c.b16 %v476, %v475
    %v488 = vpack.c.b16 %v478, %v477
    %v489 = vpack.c.b16 %v480, %v479
    %v490 = vpack.c.b16 %v482, %v481
    %499 = vmatpush.bf16.msra.mxu0 %v490
    %500 = vmatpush.bf16.msra.mxu0 %v489
    %501 = vmatpush.bf16.msra.mxu0 %v488
    %502 = vmatpush.bf16.msra.mxu0 %v487
    %503 = vmatpush.bf16.msra.mxu0 %v486
    %504 = vmatpush.bf16.msra.mxu0 %v485
    %505 = vmatpush.bf16.msra.mxu0 %v484
    %506 = vmatpush.bf16.msra.mxu0 %v483
    %507 = vmatmul.bf16.gmra.mxu0 %v426
    %v508 = vpop.f32.mrf.mxu0
    %v509 = vadd.f32 0.0, %v508
    %v510 = vpop.f32.mrf.mxu0
    %v511 = vadd.f32 0.0, %v510
    %512 = vmatmul.bf16.gmra.mxu0 %v427
    %v513 = vpop.f32.mrf.mxu0
    %v514 = vadd.f32 0.0, %v513
    %v515 = vpop.f32.mrf.mxu0
    %v516 = vadd.f32 0.0, %v515
    %517 = vmatmul.bf16.gmra.mxu0 %v428
    %v518 = vpop.f32.mrf.mxu0
    %v519 = vadd.f32 0.0, %v518
    %v520 = vpop.f32.mrf.mxu0
    %v521 = vadd.f32 0.0, %v520
    %522 = vmatmul.bf16.gmra.mxu0 %v429
    %v523 = vpop.f32.mrf.mxu0
    %v524 = vadd.f32 0.0, %v523
    %v525 = vpop.f32.mrf.mxu0
    %v526 = vadd.f32 0.0, %v525
    %527 = vmatmul.bf16.gmra.mxu0 %v430
    %v528 = vpop.f32.mrf.mxu0
    %v529 = vadd.f32 0.0, %v528
    %v530 = vpop.f32.mrf.mxu0
    %v531 = vadd.f32 0.0, %v530
    %532 = vmatmul.bf16.gmra.mxu0 %v431
    %v533 = vpop.f32.mrf.mxu0
    %v534 = vadd.f32 0.0, %v533
    %v535 = vpop.f32.mrf.mxu0
    %v536 = vadd.f32 0.0, %v535
    %537 = vmatmul.bf16.gmra.mxu0 %v432
    %v538 = vpop.f32.mrf.mxu0
    %v539 = vadd.f32 0.0, %v538
    %v540 = vpop.f32.mrf.mxu0
    %v541 = vadd.f32 0.0, %v540
    %542 = vmatmul.bf16.gmra.mxu0 %v433
    %v543 = vpop.f32.mrf.mxu0
    %v544 = vadd.f32 0.0, %v543
    %v545 = vpop.f32.mrf.mxu0
    %v546 = vadd.f32 0.0, %v545
    %547 = vdwg.mxu0
    %v548 = vpack.c.bf16 %v511, %v509
    %v549 = vpack.c.bf16 %v516, %v514
    %v550 = vpack.c.bf16 %v521, %v519
    %v551 = vpack.c.bf16 %v526, %v524
    %v552 = vpack.c.bf16 %v531, %v529
    %v553 = vpack.c.bf16 %v536, %v534
    %v554 = vpack.c.bf16 %v541, %v539
    %v555 = vpack.c.bf16 %v546, %v544
    %v557 = vperm.slane %v450, 0
    %559 = vmatpush.bf16.msra.mxu0 %v555
    %560 = vmatpush.bf16.msra.mxu0 %v554
    %561 = vmatpush.bf16.msra.mxu0 %v553
    %562 = vmatpush.bf16.msra.mxu0 %v552
    %563 = vmatpush.bf16.msra.mxu0 %v551
    %564 = vmatpush.bf16.msra.mxu0 %v550
    %565 = vmatpush.bf16.msra.mxu0 %v549
    %566 = vmatpush.bf16.msra.mxu0 %v548
    %567 = vmatmul.bf16.gmra.mxu0 %v189
    %v568 = vpop.f32.mrf.mxu0
    %v569 = vadd.f32 %v557, %v568
    %v570 = vpop.f32.mrf.mxu0
    %v571 = vadd.f32 %v557, %v570
    %572 = vmatmul.bf16.gmra.mxu0 %v190
    %v573 = vpop.f32.mrf.mxu0
    %v574 = vadd.f32 %v557, %v573
    %v575 = vpop.f32.mrf.mxu0
    %v576 = vadd.f32 %v557, %v575
    %577 = vmatmul.bf16.gmra.mxu0 %v191
    %v578 = vpop.f32.mrf.mxu0
    %v579 = vadd.f32 %v557, %v578
    %v580 = vpop.f32.mrf.mxu0
    %v581 = vadd.f32 %v557, %v580
    %582 = vmatmul.bf16.gmra.mxu0 %v192
    %v583 = vpop.f32.mrf.mxu0
    %v584 = vadd.f32 %v557, %v583
    %v585 = vpop.f32.mrf.mxu0
    %v586 = vadd.f32 %v557, %v585
    %587 = vmatmul.bf16.gmra.mxu0 %v193
    %v588 = vpop.f32.mrf.mxu0
    %v589 = vadd.f32 %v557, %v588
    %v590 = vpop.f32.mrf.mxu0
    %v591 = vadd.f32 %v557, %v590
    %592 = vmatmul.bf16.gmra.mxu0 %v194
    %v593 = vpop.f32.mrf.mxu0
    %v594 = vadd.f32 %v557, %v593
    %v595 = vpop.f32.mrf.mxu0
    %v596 = vadd.f32 %v557, %v595
    %597 = vmatmul.bf16.gmra.mxu0 %v195
    %v598 = vpop.f32.mrf.mxu0
    %v599 = vadd.f32 %v557, %v598
    %v600 = vpop.f32.mrf.mxu0
    %v601 = vadd.f32 %v557, %v600
    %602 = vmatmul.bf16.gmra.mxu0 %v196
    %v603 = vpop.f32.mrf.mxu0
    %v604 = vadd.f32 %v557, %v603
    %v605 = vpop.f32.mrf.mxu0
    %v606 = vadd.f32 %v557, %v605
    %607 = vdwg.mxu0
    %v608 = vmax.f32 %v569, 0.0
    %v609 = vmax.f32 %v571, 0.0
    %v610 = vmax.f32 %v574, 0.0
    %v611 = vmax.f32 %v576, 0.0
    %v612 = vmax.f32 %v579, 0.0
    %v613 = vmax.f32 %v581, 0.0
    %v614 = vmax.f32 %v584, 0.0
    %v615 = vmax.f32 %v586, 0.0
    %v616 = vmax.f32 %v589, 0.0
    %v617 = vmax.f32 %v591, 0.0
    %v618 = vmax.f32 %v594, 0.0
    %v619 = vmax.f32 %v596, 0.0
    %v620 = vmax.f32 %v599, 0.0
    %v621 = vmax.f32 %v601, 0.0
    %v622 = vmax.f32 %v604, 0.0
    %v623 = vmax.f32 %v606, 0.0
    %v624 = vpack.c.bf16 %v609, %v608
    %v625 = vpack.c.bf16 %v611, %v610
    %v626 = vpack.c.bf16 %v613, %v612
    %v627 = vpack.c.bf16 %v615, %v614
    %v628 = vpack.c.bf16 %v617, %v616
    %v629 = vpack.c.bf16 %v619, %v618
    %v630 = vpack.c.bf16 %v621, %v620
    %v631 = vpack.c.bf16 %v623, %v622
    %v632 = vld [vmem:[#allocation10] sm:$0xf]
    %v633 = vld [vmem:[#allocation10 + $0x4] sm:$0xf]
    %v634 = vld [vmem:[#allocation10 + $0x8] sm:$0xf]
    %v635 = vld [vmem:[#allocation10 + $0xc] sm:$0xf]
    %v636 = vld [vmem:[#allocation10 + $0x10] sm:$0xf]
    %v637 = vld [vmem:[#allocation10 + $0x14] sm:$0xf]
    %v638 = vld [vmem:[#allocation10 + $0x18] sm:$0xf]
    %v639 = vld [vmem:[#allocation10 + $0x1c] sm:$0xf]
    %v640 = vld [vmem:[#allocation10 + $0x20] sm:$0xf]
    %v641 = vld [vmem:[#allocation10 + $0x24] sm:$0xf]
    %v642 = vld [vmem:[#allocation10 + $0x28] sm:$0xf]
    %v643 = vld [vmem:[#allocation10 + $0x2c] sm:$0xf]
    %v644 = vld [vmem:[#allocation10 + $0x30] sm:$0xf]
    %v645 = vld [vmem:[#allocation10 + $0x34] sm:$0xf]
    %v646 = vld [vmem:[#allocation10 + $0x38] sm:$0xf]
    %v647 = vld [vmem:[#allocation10 + $0x3c] sm:$0xf]
    %v648 = vld [vmem:[%s7] sm:$0x1]
    %v665 = vunpack.c.l.b16 %v632
    %v666 = vunpack.c.l.b16 %v633
    %v667 = vunpack.c.l.b16 %v634
    %v668 = vunpack.c.l.b16 %v635
    %v669 = vunpack.c.l.b16 %v636
    %v670 = vunpack.c.l.b16 %v637
    %v671 = vunpack.c.l.b16 %v638
    %v672 = vunpack.c.l.b16 %v639
    %v673 = vunpack.c.l.b16 %v640
    %v674 = vunpack.c.l.b16 %v641
    %v675 = vunpack.c.l.b16 %v642
    %v676 = vunpack.c.l.b16 %v643
    %v677 = vunpack.c.l.b16 %v644
    %v678 = vunpack.c.l.b16 %v645
    %v679 = vunpack.c.l.b16 %v646
    %v680 = vunpack.c.l.b16 %v647
    %v681 = vpack.c.b16 %v666, %v665
    %v682 = vpack.c.b16 %v668, %v667
    %v683 = vpack.c.b16 %v670, %v669
    %v684 = vpack.c.b16 %v672, %v671
    %v685 = vpack.c.b16 %v674, %v673
    %v686 = vpack.c.b16 %v676, %v675
    %v687 = vpack.c.b16 %v678, %v677
    %v688 = vpack.c.b16 %v680, %v679
    %697 = vmatpush.bf16.msra.mxu0 %v688
    %698 = vmatpush.bf16.msra.mxu0 %v687
    %699 = vmatpush.bf16.msra.mxu0 %v686
    %700 = vmatpush.bf16.msra.mxu0 %v685
    %701 = vmatpush.bf16.msra.mxu0 %v684
    %702 = vmatpush.bf16.msra.mxu0 %v683
    %703 = vmatpush.bf16.msra.mxu0 %v682
    %704 = vmatpush.bf16.msra.mxu0 %v681
    %705 = vmatmul.bf16.gmra.mxu0 %v624
    %v706 = vpop.f32.mrf.mxu0
    %v707 = vadd.f32 0.0, %v706
    %v708 = vpop.f32.mrf.mxu0
    %v709 = vadd.f32 0.0, %v708
    %710 = vmatmul.bf16.gmra.mxu0 %v625
    %v711 = vpop.f32.mrf.mxu0
    %v712 = vadd.f32 0.0, %v711
    %v713 = vpop.f32.mrf.mxu0
    %v714 = vadd.f32 0.0, %v713
    %715 = vmatmul.bf16.gmra.mxu0 %v626
    %v716 = vpop.f32.mrf.mxu0
    %v717 = vadd.f32 0.0, %v716
    %v718 = vpop.f32.mrf.mxu0
    %v719 = vadd.f32 0.0, %v718
    %720 = vmatmul.bf16.gmra.mxu0 %v627
    %v721 = vpop.f32.mrf.mxu0
    %v722 = vadd.f32 0.0, %v721
    %v723 = vpop.f32.mrf.mxu0
    %v724 = vadd.f32 0.0, %v723
    %725 = vmatmul.bf16.gmra.mxu0 %v628
    %v726 = vpop.f32.mrf.mxu0
    %v727 = vadd.f32 0.0, %v726
    %v728 = vpop.f32.mrf.mxu0
    %v729 = vadd.f32 0.0, %v728
    %730 = vmatmul.bf16.gmra.mxu0 %v629
    %v731 = vpop.f32.mrf.mxu0
    %v732 = vadd.f32 0.0, %v731
    %v733 = vpop.f32.mrf.mxu0
    %v734 = vadd.f32 0.0, %v733
    %735 = vmatmul.bf16.gmra.mxu0 %v630
    %v736 = vpop.f32.mrf.mxu0
    %v737 = vadd.f32 0.0, %v736
    %v738 = vpop.f32.mrf.mxu0
    %v739 = vadd.f32 0.0, %v738
    %740 = vmatmul.bf16.gmra.mxu0 %v631
    %v741 = vpop.f32.mrf.mxu0
    %v742 = vadd.f32 0.0, %v741
    %v743 = vpop.f32.mrf.mxu0
    %v744 = vadd.f32 0.0, %v743
    %745 = vdwg.mxu0
    %v746 = vpack.c.bf16 %v709, %v707
    %v747 = vpack.c.bf16 %v714, %v712
    %v748 = vpack.c.bf16 %v719, %v717
    %v749 = vpack.c.bf16 %v724, %v722
    %v750 = vpack.c.bf16 %v729, %v727
    %v751 = vpack.c.bf16 %v734, %v732
    %v752 = vpack.c.bf16 %v739, %v737
    %v753 = vpack.c.bf16 %v744, %v742
    %v755 = vperm.slane %v648, 0
    %757 = vmatpush.bf16.msra.mxu0 %v753
    %758 = vmatpush.bf16.msra.mxu0 %v752
    %759 = vmatpush.bf16.msra.mxu0 %v751
    %760 = vmatpush.bf16.msra.mxu0 %v750
    %761 = vmatpush.bf16.msra.mxu0 %v749
    %762 = vmatpush.bf16.msra.mxu0 %v748
    %763 = vmatpush.bf16.msra.mxu0 %v747
    %764 = vmatpush.bf16.msra.mxu0 %v746
    %765 = vmatmul.bf16.gmra.mxu0 %v189
    %v766 = vpop.f32.mrf.mxu0
    %v767 = vadd.f32 %v755, %v766
    %v768 = vpop.f32.mrf.mxu0
    %v769 = vadd.f32 %v755, %v768
    %770 = vmatmul.bf16.gmra.mxu0 %v190
    %v771 = vpop.f32.mrf.mxu0
    %v772 = vadd.f32 %v755, %v771
    %v773 = vpop.f32.mrf.mxu0
    %v774 = vadd.f32 %v755, %v773
    %775 = vmatmul.bf16.gmra.mxu0 %v191
    %v776 = vpop.f32.mrf.mxu0
    %v777 = vadd.f32 %v755, %v776
    %v778 = vpop.f32.mrf.mxu0
    %v779 = vadd.f32 %v755, %v778
    %780 = vmatmul.bf16.gmra.mxu0 %v192
    %v781 = vpop.f32.mrf.mxu0
    %v782 = vadd.f32 %v755, %v781
    %v783 = vpop.f32.mrf.mxu0
    %v784 = vadd.f32 %v755, %v783
    %785 = vmatmul.bf16.gmra.mxu0 %v193
    %v786 = vpop.f32.mrf.mxu0
    %v787 = vadd.f32 %v755, %v786
    %v788 = vpop.f32.mrf.mxu0
    %v789 = vadd.f32 %v755, %v788
    %790 = vmatmul.bf16.gmra.mxu0 %v194
    %v791 = vpop.f32.mrf.mxu0
    %v792 = vadd.f32 %v755, %v791
    %v793 = vpop.f32.mrf.mxu0
    %v794 = vadd.f32 %v755, %v793
    %795 = vmatmul.bf16.gmra.mxu0 %v195
    %v796 = vpop.f32.mrf.mxu0
    %v797 = vadd.f32 %v755, %v796
    %v798 = vpop.f32.mrf.mxu0
    %v799 = vadd.f32 %v755, %v798
    %800 = vmatmul.bf16.gmra.mxu0 %v196
    %v801 = vpop.f32.mrf.mxu0
    %v802 = vadd.f32 %v755, %v801
    %v803 = vpop.f32.mrf.mxu0
    %v804 = vadd.f32 %v755, %v803
    %805 = vdwg.mxu0
    %806 = vst [vmem:[#allocation11] sm:$0xff] %v767
    %807 = vst [vmem:[#allocation11 + $0x8] sm:$0xff] %v769
    %808 = vst [vmem:[#allocation11 + $0x10] sm:$0xff] %v772
    %809 = vst [vmem:[#allocation11 + $0x18] sm:$0xff] %v774
    %810 = vst [vmem:[#allocation11 + $0x20] sm:$0xff] %v777
    %811 = vst [vmem:[#allocation11 + $0x28] sm:$0xff] %v779
    %812 = vst [vmem:[#allocation11 + $0x30] sm:$0xff] %v782
    %813 = vst [vmem:[#allocation11 + $0x38] sm:$0xff] %v784
    %814 = vst [vmem:[#allocation11 + $0x40] sm:$0xff] %v787
    %815 = vst [vmem:[#allocation11 + $0x48] sm:$0xff] %v789
    %816 = vst [vmem:[#allocation11 + $0x50] sm:$0xff] %v792
    %817 = vst [vmem:[#allocation11 + $0x58] sm:$0xff] %v794
    %818 = vst [vmem:[#allocation11 + $0x60] sm:$0xff] %v797
    %819 = vst [vmem:[#allocation11 + $0x68] sm:$0xff] %v799
    %820 = vst [vmem:[#allocation11 + $0x70] sm:$0xff] %v802
    %821 = vst [vmem:[#allocation11 + $0x78] sm:$0xff] %v804
    // Predicated region
    $region54: #{tpu_custom_call.1} parent=1 // pred_check
      _
    $region55: #{tpu_custom_call.1} parent=1 // pred_check_branch
      %823 = sbr.rel (0) target = $region57
    $region56: #{tpu_custom_call.1} parent=1 // pred_region
      %825 = vsyncadd [#allocation4], 0
      %s826 = sshll.u32 [#allocation11], 4
      %s827 = int_to_ptr.vmem [resolvable:$true] %s826
      %s828 = sshll.u32 %s8, 4
      %s829 = int_to_ptr.hbm [resolvable:$true] %s828
      %834 = dma.vmem_to_hbm [thread:$0]  %s827, 2048, %s829, [#allocation4], 128, 128, 8
    $region57: #{tpu_custom_call.1} parent=1 // pred_fallthru
      _
    // Predicated region
    $region58: #{tpu_custom_call.1} parent=1 // pred_check
      _
    $region59: #{tpu_custom_call.1} parent=1 // pred_check_branch
      %836 = sbr.rel (0) target = $region61
    $region60: #{tpu_custom_call.1} parent=1 // pred_region
      %838 = dma.done [#allocation4], 2048
    $region61: #{tpu_custom_call.1} parent=1 // pred_fallthru
      _
    %839 = vsyncpa [#allocation3], 1
    %840 = vsyncpa [#allocation6], 1
    %841 = vsyncpa [#allocation9], 1
    %842 = vsyncpa [#allocation4], 1

</llo_original>
